<compile_context>
chip_gen: v6e
topology: v6e:2x2x1
jax: 0.10.0
libtpu: 0.0.40
codegen_flags: <defaults>
</compile_context>

<pallas_src>
import math

import jax
import jax.numpy as jnp
import numpy as np
from jax.experimental import pallas as pl
from jax.experimental.pallas import tpu as pltpu


# --------------------------------------------------------------------------- kernel
def _spatial_dropout_kernel(noise_ref, x_ref, o_ref):
    # noise_ref: (b_tile, 1, E) inverted-dropout scale (0 or 1/keep)
    # x_ref/o_ref: (b_tile, t_tile, E) activation block
    o_ref[...] = x_ref[...] * noise_ref[...]  # broadcast over the timesteps axis


# ----------------------------------------------------------------- tiling heuristics
def _block_byte_target():
    """Generation-aware per-block byte target (HBM-roofline kernel)."""
    try:
        kind = jax.devices()[0].device_kind.lower()
    except Exception:
        kind = ""
    if "v5 lite" in kind or "v5e" in kind or "v5litepod" in kind:
        return 3 << 20
    # v6e and v7x (and unknown): 4 MiB keeps live double-buffered VMEM ~16-20 MiB,
    # safely under v7x's 64 MiB physical / 32 MiB default scoped budget.
    return 4 << 20


def _largest_divisor_leq(n, cap):
    cap = max(1, min(n, cap))
    for d in range(cap, 0, -1):
        if n % d == 0:
            return d
    return 1


def _pick_t_tile(T, budget):
    """Multiple of 8 that (preferably) divides T, no larger than `budget`."""
    if budget >= T or T <= 8:
        return T
    t = max(8, (min(budget, T) // 8) * 8)
    for cand in range(t, 7, -8):          # prefer a divisor of T -> no ragged tail
        if T % cand == 0:
            return cand
    return t                               # ragged tail, still correct (block clipping)


def _choose_tiles(B, T, E, itemsize, target_bytes):
    row_bytes = max(1, E * itemsize)
    t_budget = max(1, target_bytes // row_bytes)
    if t_budget >= T:
        t_tile = T
        b_budget = max(1, target_bytes // (T * row_bytes))
        b_tile = _largest_divisor_leq(B, b_budget)
    else:
        b_tile = 1
        t_tile = _pick_t_tile(T, t_budget)
    return b_tile, t_tile


def _ensure_splittable(B, T, b_tile, t_tile, total_bytes):
    """v7x has 2 TensorCores: make sure a non-trivial kernel has >=2 grid steps."""
    if pl.cdiv(B, b_tile) * pl.cdiv(T, t_tile) >= 2 or total_bytes < (512 << 10):
        return b_tile, t_tile
    if b_tile > 1:
        return max(1, b_tile // 2), t_tile
    if t_tile >= 16:
        return b_tile, max(8, ((t_tile // 2) // 8) * 8)
    return b_tile, t_tile


def _fold_factor(T, E):
    """Smallest g with (g*E) % 128 == 0 and T % g == 0; 1 if none (or already dense)."""
    if E % 128 == 0:
        return 1
    g = 128 // math.gcd(E, 128)
    if 1 < g <= T and T % g == 0:
        return g
    return 1


# ---------------------------------------------------------------------------- wrapper
def spatial_dropout(x, *, drop=0.5, seed=0, key=None, training=True,
                    t_tile=None, donate=False):
    """Forward pass of SpatialDropout with the module's default noise_shape.

    noise_shape = (batch, 1, ..., 1, channels): the keep/drop decision is shared
    across all middle (timestep / spatial) axes.
    """
    if not training or drop == 0.0:
        return x
    if drop == 1.0:
        return jnp.zeros_like(x)

    orig_shape = x.shape
    if x.ndim < 3:
        raise ValueError("spatial_dropout expects rank >= 3 (batch, ..., channels)")
    if x.ndim > 3:
        # Fold all middle axes into one "timesteps" axis; the noise broadcasts over it.
        x = x.reshape(x.shape[0], -1, x.shape[-1])

    B, T, E = x.shape
    keep = 1.0 - float(drop)

    # TODO(synk): PyTorch's bernoulli_ RNG stream cannot be reproduced bit-exactly;
    # the mask is sampled with jax.random (same Bernoulli(1-drop) semantics).
    if key is None:
        key = jax.random.PRNGKey(seed)
    keep_mask = jax.random.bernoulli(key, p=keep, shape=(B, 1, E))
    noise = keep_mask.astype(x.dtype) * jnp.asarray(1.0 / keep, dtype=x.dtype)

    # Lane-dense output layout: fold g timesteps into the lane axis when E is not a
    # multiple of 128, so stores are full-width vst instead of masked partial stores.
    g = _fold_factor(T, E) if t_tile is None else 1
    if g > 1:
        xk = x.reshape(B, T // g, g * E)
        noise_k = jnp.tile(noise, (1, 1, g))
        Tk, Ek = T // g, g * E
    else:
        xk, noise_k, Tk, Ek = x, noise, T, E

    itemsize = jnp.dtype(x.dtype).itemsize
    target = _block_byte_target()

    if t_tile is None:
        b_tile, tt = _choose_tiles(B, Tk, Ek, itemsize, target)
    else:
        tt = min(int(t_tile), Tk)
        if tt < Tk and tt % 8 != 0:          # (8,128) rule: sublane multiple of 8
            tt = max(8, (tt // 8) * 8)
        b_budget = max(1, target // max(1, tt * Ek * itemsize))
        b_tile = _largest_divisor_leq(B, b_budget)

    total_bytes = B * Tk * Ek * itemsize
    b_tile, tt = _ensure_splittable(B, Tk, b_tile, tt, total_bytes)

    grid = (pl.cdiv(B, b_tile), pl.cdiv(Tk, tt))

    # Pallas double-buffers the x and out blocks; size the scoped VMEM limit for that
    # (cap at 48 MiB so it is always legal, incl. v7x's 64 MiB physical VMEM).
    block_bytes = b_tile * tt * Ek * itemsize
    noise_block_bytes = b_tile * 8 * Ek * itemsize        # (b,1,E) pads to 8 sublanes
    vmem_limit = int(min(48 << 20,
                         max(16 << 20, 4 * block_bytes + 2 * noise_block_bytes + (4 << 20))))

    extra = {}
    if donate:
        # Dropout output usually replaces the activation in place.
        extra["input_output_aliases"] = {1: 0}

    out = pl.pallas_call(
        _spatial_dropout_kernel,
        out_shape=jax.ShapeDtypeStruct((B, Tk, Ek), x.dtype),
        grid=grid,
        in_specs=[
            pl.BlockSpec((b_tile, 1, Ek), lambda b, t: (b, 0, 0)),   # shared noise row
            pl.BlockSpec((b_tile, tt, Ek), lambda b, t: (b, t, 0)),  # activation tile
        ],
        out_specs=pl.BlockSpec((b_tile, tt, Ek), lambda b, t: (b, t, 0)),
        compiler_params=pltpu.CompilerParams(
            dimension_semantics=("parallel", "parallel"),
            vmem_limit_bytes=vmem_limit),
        **extra,
    )(noise_k, xk)

    return out.reshape(orig_shape)


# ------------------------------------------------------------------------ self-check
def _check_semantics(x, out, drop):
    x_np = np.asarray(x, dtype=np.float64).reshape(x.shape[0], -1, x.shape[-1])
    out_np = np.asarray(out, dtype=np.float64).reshape(x_np.shape)
    keep = 1.0 - drop
    scaled = x_np / keep
    nz = np.abs(x_np) > 1e-30                       # avoid 0/0 in the ratio test
    ratio = np.where(nz, out_np / np.where(nz, scaled, 1.0), 1.0)
    kept = np.isclose(ratio, 1.0, atol=1e-4)
    dropped = np.isclose(ratio, 0.0, atol=1e-6)
    # 1) every element is either dropped (0) or scaled by exactly 1/(1-drop)
    assert np.all(kept | dropped | ~nz), "SpatialDropout values violated"
    # 2) keep/drop decision is identical along the timesteps axis (noise_shape=(B,1,E))
    n_nz = nz.sum(axis=1)
    n_kept = (kept & nz).sum(axis=1)
    assert np.all((n_kept == 0) | (n_kept == n_nz)), "SpatialDropout channel-sharing violated"


if __name__ == "__main__":
    drop = 0.5
    root = jax.random.PRNGKey(0)
    k_x1, k_x2, k_n2, k_x3 = jax.random.split(root, 4)

    # Small demo shape consistent with the module: batch=2, timesteps=8, embedding=32.
    # (E=32 < 128 exercises the lane-dense folding path: g=4 -> blocks of lane width 128.)
    B, T, E = 2, 8, 32
    x = jax.random.normal(k_x1, (B, T, E), dtype=jnp.float32)
    out = jax.block_until_ready(spatial_dropout(x, drop=drop, seed=0, training=True))
    _check_semantics(x, out, drop)

    # Exercise the tiled grid (multiple timestep tiles sharing one noise row), E=128 dense.
    x2 = jax.random.normal(k_x2, (2, 24, 128), dtype=jnp.float32)
    out2 = jax.block_until_ready(
        spatial_dropout(x2, drop=drop, key=k_n2, training=True, t_tile=8))
    _check_semantics(x2, out2, drop)

    # Rank-4 input: middle axes folded into "timesteps"; same per-(batch, channel) mask.
    x3 = jax.random.normal(k_x3, (2, 4, 8, 32), dtype=jnp.float32)
    out3 = jax.block_until_ready(spatial_dropout(x3, drop=drop, seed=3, training=True))
    _check_semantics(x3.reshape(2, 32, 32), out3.reshape(2, 32, 32), drop)

    # eval / drop==0 paths return the input unchanged
    assert np.allclose(np.asarray(spatial_dropout(x, drop=drop, training=False)),
                       np.asarray(x))
    assert np.allclose(np.asarray(spatial_dropout(x, drop=0.0, training=True)),
                       np.asarray(x))

    print("KERNEL_OK")
</pallas_src>

<mosaic_0001>
module attributes {stable_mosaic.version = 11 : i64} {
  func.func @_spatial_dropout_kernel(%arg0: i32, %arg1: i32, %arg2: memref<2x1x128xf32, #tpu.memory_space<vmem>>, %arg3: memref<2x2x128xf32, #tpu.memory_space<vmem>>, %arg4: memref<2x2x128xf32, #tpu.memory_space<vmem>>) attributes {dimension_semantics = [#tpu.dimension_semantics<parallel>, #tpu.dimension_semantics<parallel>], iteration_bounds = array<i64: 1, 1>, scalar_prefetch = 0 : i64, scratch_operands = 0 : i64, tpu.core_type = #tpu.core_type<tc>, window_params = [{transform_indices = @transform_0, window_bounds = array<i64: 2, 1, 128>}, {transform_indices = @transform_1, window_bounds = array<i64: 2, 2, 128>}, {transform_indices = @transform_2, window_bounds = array<i64: 2, 2, 128>}]} {
    %c0 = arith.constant 0 : index
    %c0_0 = arith.constant 0 : index
    %c0_1 = arith.constant 0 : index
    %0 = vector.load %arg3[%c0, %c0_0, %c0_1] : memref<2x2x128xf32, #tpu.memory_space<vmem>>, vector<2x2x128xf32>
    %c0_2 = arith.constant 0 : index
    %c0_3 = arith.constant 0 : index
    %c0_4 = arith.constant 0 : index
    %1 = vector.load %arg2[%c0_2, %c0_3, %c0_4] : memref<2x1x128xf32, #tpu.memory_space<vmem>>, vector<2x1x128xf32>
    %2 = vector.broadcast %1 : vector<2x1x128xf32> to vector<2x2x128xf32>
    %3 = arith.mulf %0, %2 : vector<2x2x128xf32>
    %c0_5 = arith.constant 0 : index
    %c0_6 = arith.constant 0 : index
    %c0_7 = arith.constant 0 : index
    %4 = vector.load %arg4[%c0_5, %c0_6, %c0_7] : memref<2x2x128xf32, #tpu.memory_space<vmem>>, vector<2x2x128xf32>
    tpu.vector_store %arg4[%c0_5, %c0_6, %c0_7], %3 {strides = array<i32>} : memref<2x2x128xf32, #tpu.memory_space<vmem>>, vector<2x2x128xf32>,
    return
  }
  func.func @transform_0(%arg0: i32, %arg1: i32) -> (i32, i32, i32) {
    %c0_i32 = arith.constant 0 : i32
    %c0_i32_0 = arith.constant 0 : i32
    %c0_i32_1 = arith.constant 0 : i32
    return %arg0, %c0_i32, %c0_i32_0 : i32, i32, i32
  }
  func.func @transform_1(%arg0: i32, %arg1: i32) -> (i32, i32, i32) {
    %c0_i32 = arith.constant 0 : i32
    %c0_i32_0 = arith.constant 0 : i32
    return %arg0, %arg1, %c0_i32 : i32, i32, i32
  }
  func.func @transform_2(%arg0: i32, %arg1: i32) -> (i32, i32, i32) {
    %c0_i32 = arith.constant 0 : i32
    %c0_i32_0 = arith.constant 0 : i32
    return %arg0, %arg1, %c0_i32 : i32, i32, i32
  }
}

</mosaic_0001>

<llo_original>
// kernel: tpu_custom_call.1
$region0: #{tpu_custom_call.1}
  #allocation0 [shape = 'u32[]', space=smem, size = 0x4, offset = 0x4, fixed_abs, tag = 'smem constant byte address 0x4 - core index']
  #allocation1 [shape = 'u32[144,128]{1,0:T(1,128)}', space=vmem, size = 0x12000, scoped, tag = 'internal scratch']
  %s0 = inlined_call_operand.hbm [shape: f32[2,1,128], index: 0, kind: input, shape index: {}]
  %s1 = inlined_call_operand.hbm [shape: f32[2,2,128], index: 1, kind: input, shape index: {}]
  %s2 = inlined_call_operand.hbm [shape: f32[2,2,128], index: 2, kind: output, shape index: {}]
  %s3 = sld [smem:[#allocation0]]
  $region26: #{tpu_custom_call.1} parent=0
    _
  %s5 = ssub.s32 1, %s3
  %s6 = scalar_select 0, %s5, %s3
  $region1: #{tpu_custom_call.1} parent=0
    #allocation2 [shape = 'u8[1024]{0}', space=vmem, size = 0x400, scoped, tag = 'input window, operand 0, single buffered']
    #allocation3 [shape = 's32[1]{0}', space=sflag, size = 0x4, scoped, tag = 'scoped memory for tpu_custom_call.1']
    #allocation4 [shape = 's32[1]{0}', space=sflag, size = 0x4, scoped, tag = 'scoped memory for tpu_custom_call.1']
    #allocation5 [shape = 'u8[2048]{0}', space=vmem, size = 0x800, scoped, tag = 'input window, operand 1, single buffered']
    #allocation6 [shape = 's32[1]{0}', space=sflag, size = 0x4, scoped, tag = 'scoped memory for tpu_custom_call.1']
    #allocation7 [shape = 'u8[2048]{0}', space=vmem, size = 0x800, scoped, tag = 'output window, operand 0, single buffered']
    %7 = vsyncpa [#allocation3], 0
    %8 = vsyncpa [#allocation6], 0
    %9 = vsyncpa [#allocation4], 0
    // Predicated region
    $region2: #{tpu_custom_call.1} parent=1 // pred_check
      _
    $region3: #{tpu_custom_call.1} parent=1 // pred_check_branch
      %11 = sbr.rel (0) target = $region5
    $region4: #{tpu_custom_call.1} parent=1 // pred_region
      %s13 = ssub.s32 32, 32
      %14 = vsyncadd [#allocation3], %s13
      %s15 = sshll.u32 [#allocation2], 4
      %s16 = int_to_ptr.vmem [resolvable:$true] %s15
      %21 = dma.hbm_to_vmem [thread:$0]  %s0, 32, %s16, [#allocation3], 16, 16, 1
    $region5: #{tpu_custom_call.1} parent=1 // pred_fallthru
      _
    // Predicated region
    $region6: #{tpu_custom_call.1} parent=1 // pred_check
      _
    $region7: #{tpu_custom_call.1} parent=1 // pred_check_branch
      %23 = sbr.rel (0) target = $region9
    $region8: #{tpu_custom_call.1} parent=1 // pred_region
      %s25 = ssub.s32 64, 64
      %26 = vsyncadd [#allocation6], %s25
      %s27 = sshll.u32 [#allocation5], 4
      %s28 = int_to_ptr.vmem [resolvable:$true] %s27
      %33 = dma.hbm_to_vmem [thread:$0]  %s1, 64, %s28, [#allocation6], 32, 32, 2
    $region9: #{tpu_custom_call.1} parent=1 // pred_fallthru
      _
    // Predicated region
    $region10: #{tpu_custom_call.1} parent=1 // pred_check
      _
    $region11: #{tpu_custom_call.1} parent=1 // pred_check_branch
      %35 = sbr.rel (0) target = $region13
    $region12: #{tpu_custom_call.1} parent=1 // pred_region
      %36 = dma.done [#allocation3], 32
    $region13: #{tpu_custom_call.1} parent=1 // pred_fallthru
      _
    // Predicated region
    $region14: #{tpu_custom_call.1} parent=1 // pred_check
      _
    $region15: #{tpu_custom_call.1} parent=1 // pred_check_branch
      %38 = sbr.rel (0) target = $region17
    $region16: #{tpu_custom_call.1} parent=1 // pred_region
      %39 = dma.done [#allocation6], 64
    $region17: #{tpu_custom_call.1} parent=1 // pred_fallthru
      _
    %v40 = vld [vmem:[#allocation5] sm:$0x3]
    %v41 = vld [vmem:[#allocation5 + $0x2] sm:$0x3]
    %v42 = vld [vmem:[#allocation2] sm:$0x1]
    %v43 = vld [vmem:[#allocation2 + $0x1] sm:$0x1]
    %v46 = vlaneseq
    %v47 = vshrl.u32 %v46, 7
    %v48 = vsub.s32 0, %v47
    %v49 = vrot.slane %v42, %v48
    %v50 = vlaneseq
    %v51 = vshrl.u32 %v50, 7
    %v52 = vsub.s32 0, %v51
    %v53 = vrot.slane %v43, %v52
    %v56 = vmul.f32 %v40, %v49
    %v57 = vmul.f32 %v41, %v53
    %58 = vst [vmem:[#allocation7] sm:$0x3] %v56
    %59 = vst [vmem:[#allocation7 + $0x2] sm:$0x3] %v57
    // Predicated region
    $region18: #{tpu_custom_call.1} parent=1 // pred_check
      _
    $region19: #{tpu_custom_call.1} parent=1 // pred_check_branch
      %61 = sbr.rel (0) target = $region21
    $region20: #{tpu_custom_call.1} parent=1 // pred_region
      %s63 = ssub.s32 64, 64
      %64 = vsyncadd [#allocation4], %s63
      %s65 = sshll.u32 [#allocation7], 4
      %s66 = int_to_ptr.vmem [resolvable:$true] %s65
      %71 = dma.vmem_to_hbm [thread:$0]  %s66, 64, %s2, [#allocation4], 32, 32, 2
    $region21: #{tpu_custom_call.1} parent=1 // pred_fallthru
      _
    // Predicated region
    $region22: #{tpu_custom_call.1} parent=1 // pred_check
      _
    $region23: #{tpu_custom_call.1} parent=1 // pred_check_branch
      %73 = sbr.rel (0) target = $region25
    $region24: #{tpu_custom_call.1} parent=1 // pred_region
      %74 = dma.done [#allocation4], 64
    $region25: #{tpu_custom_call.1} parent=1 // pred_fallthru
      _
    %75 = vsyncpa [#allocation3], 1
    %76 = vsyncpa [#allocation6], 1
    %77 = vsyncpa [#allocation4], 1

</llo_original>
